<compile_context>
chip_gen: v7x
topology: tpu7x:2x2x1
jax: 0.10.0
libtpu: 0.0.40
codegen_flags: <defaults>
</compile_context>

<pallas_src>
import jax
import jax.numpy as jnp
from jax.experimental import pallas as pl
from jax.experimental.pallas import tpu as pltpu


def _round_up(v, m):
    return ((v + m - 1) // m) * m


def gcn_kernel(pool_ref, adj_ref, x_ref, invc_ref,
               w1_ref, b1_ref, w2_ref, b2_ref,
               out_ref, acc_ref):
    # grid = (k_outer, i_inner):
    #   k (axis 0, slow) -> adj column-tile == x row-tile  (x fetched once per k)
    #   i (axis 1, fast) -> adj row-tile    == pool column-tile (tiny, cheap to re-fetch)
    k = pl.program_id(0)
    i = pl.program_id(1)

    @pl.when((k == 0) & (i == 0))
    def _init():
        acc_ref[...] = jnp.zeros_like(acc_ref)

    # (pool @ adj) @ x  -- reordered so the big (N,N) operand only multiplies a
    # G-row matrix. bf16 operands, f32 accumulation on the MXU.
    pa = jnp.dot(pool_ref[...], adj_ref[...],
                 preferred_element_type=jnp.float32)             # (G_pad, tn) f32
    acc_ref[...] += jnp.dot(pa.astype(jnp.bfloat16), x_ref[...],
                            preferred_element_type=jnp.float32)  # (G_pad, C_pad)

    @pl.when((k == pl.num_programs(0) - 1) & (i == pl.num_programs(1) - 1))
    def _finalize():
        # mean pool (exact f32 1/count) -> ReLU -> lin1 -> ReLU -> out, done once.
        pooled = jnp.maximum(acc_ref[...] * invc_ref[...], 0.0)
        z1 = jnp.dot(pooled, w1_ref[...],
                     preferred_element_type=jnp.float32) + b1_ref[...]
        z1 = jnp.maximum(z1, 0.0)
        y = jnp.dot(z1, w2_ref[...],
                    preferred_element_type=jnp.float32) + b2_ref[...]
        out_ref[...] = y


def gcnnet_forward(x, edge_index, edge_attr, batch, params, num_graphs):
    N, C = x.shape
    G = num_graphs
    w1, b1, w2, b2 = params            # (C,H), (1,H), (H,1), (1,1)
    H = w1.shape[1]

    LANE, SUB = 128, 8
    # tn=1024 bf16 adj tile = 2 MiB; x2 buffers + x/pool/weights ~ 4.7 MiB total:
    # fits default scoped VMEM on v5e (16 MiB), v6e (32 MiB) and v7x (32 MiB).
    MAX_TILE = 1024

    # --- padded sizes: lane-dense feature dims, 128-aligned node dim ---
    N_pad = max(_round_up(N, LANE), LANE)
    G_pad = _round_up(max(G, 1), SUB)
    C_pad = _round_up(C, LANE)
    H_pad = _round_up(H, LANE)
    O_pad = LANE                       # pad the scalar output dim lane-dense

    # Largest tile <= MAX_TILE (multiple of 128) that divides N_pad.
    tn = LANE
    for cand in range(LANE, min(N_pad, MAX_TILE) + 1, LANE):
        if N_pad % cand == 0:
            tn = cand
    n_tiles = N_pad // tn

    # --- glue: densify graph structure (plain JAX) ---
    src, dst = edge_index[0], edge_index[1]
    # Scatter-add straight into bf16: avoids the f32 densify-then-cast round trip
    # (~5x the kernel's HBM bytes). Duplicate-edge sums round per-add in bf16,
    # acceptable at the stated tolerance.
    adj = jnp.zeros((N_pad, N_pad), jnp.bfloat16).at[dst, src].add(
        edge_attr.astype(jnp.bfloat16))

    x_p = jnp.zeros((N_pad, C_pad), jnp.bfloat16).at[:N, :C].set(
        x.astype(jnp.bfloat16))

    # Exact 0/1 one-hot pool (exact in bf16); mean division happens in-kernel in f32.
    one_hot = (batch[None, :] == jnp.arange(G, dtype=batch.dtype)[:, None]
               ).astype(jnp.float32)
    counts = jnp.maximum(one_hot.sum(axis=1, keepdims=True), 1.0)       # (G, 1)
    pool_p = jnp.zeros((G_pad, N_pad), jnp.bfloat16).at[:G, :N].set(
        one_hot.astype(jnp.bfloat16))
    invc_p = jnp.zeros((G_pad, 1), jnp.float32).at[:G, :].set(1.0 / counts)

    w1_p = jnp.zeros((C_pad, H_pad), jnp.float32).at[:C, :H].set(w1)
    b1_p = jnp.zeros((1, H_pad), jnp.float32).at[:, :H].set(b1)
    w2_p = jnp.zeros((H_pad, O_pad), jnp.float32).at[:H, :1].set(w2)
    b2_p = jnp.zeros((1, O_pad), jnp.float32).at[:, :1].set(b2)

    # grid = (k, i): k outer/slow (x row-tile), i inner/fast (pool column-tile)
    grid = (n_tiles, n_tiles)

    bytes_accessed = (
        N_pad * N_pad * 2                       # adj streamed once
        + N_pad * C_pad * 2                     # x streamed once
        + n_tiles * G_pad * N_pad * 2           # pool re-fetched per outer step
        + (C_pad * H_pad + H_pad * O_pad + H_pad + O_pad) * 4
        + G_pad * O_pad * 4)
    flops = 2 * G_pad * N_pad * N_pad + 2 * G_pad * N_pad * C_pad

    out = pl.pallas_call(
        gcn_kernel,
        out_shape=jax.ShapeDtypeStruct((G_pad, O_pad), jnp.float32),
        grid_spec=pltpu.PrefetchScalarGridSpec(
            num_scalar_prefetch=0,
            grid=grid,
            in_specs=[
                pl.BlockSpec((G_pad, tn), lambda k, i: (0, i)),      # pool cols (tiny, fast axis)
                pl.BlockSpec((tn, tn), lambda k, i: (i, k)),         # adj tile
                pl.BlockSpec((tn, C_pad), lambda k, i: (k, 0)),      # x rows (slow axis -> streamed once)
                pl.BlockSpec((G_pad, 1), lambda k, i: (0, 0)),       # 1/|graph| (f32, resident)
                pl.BlockSpec((C_pad, H_pad), lambda k, i: (0, 0)),   # w1 (resident)
                pl.BlockSpec((1, H_pad), lambda k, i: (0, 0)),       # b1
                pl.BlockSpec((H_pad, O_pad), lambda k, i: (0, 0)),   # w2
                pl.BlockSpec((1, O_pad), lambda k, i: (0, 0)),       # b2
            ],
            out_specs=pl.BlockSpec((G_pad, O_pad), lambda k, i: (0, 0)),
            scratch_shapes=[pltpu.VMEM((G_pad, C_pad), jnp.float32)],
        ),
        compiler_params=pltpu.CompilerParams(
            # both grid axes reduce into one output block -> "arbitrary"
            dimension_semantics=("arbitrary", "arbitrary"),
        ),
        cost_estimate=pl.CostEstimate(
            flops=flops, transcendentals=0, bytes_accessed=bytes_accessed),
    )(pool_p, adj, x_p, invc_p, w1_p, b1_p, w2_p, b2_p)

    return out[:G, :1]


def reference_forward(x, edge_index, edge_attr, batch, params, num_graphs):
    N, C = x.shape
    src, dst = edge_index[0], edge_index[1]
    adj = jnp.zeros((N, N), jnp.float32).at[dst, src].add(edge_attr)
    h = adj @ x
    one_hot = (batch[None, :] == jnp.arange(num_graphs, dtype=batch.dtype)[:, None]
               ).astype(jnp.float32)
    pool = one_hot / jnp.maximum(one_hot.sum(axis=1, keepdims=True), 1.0)
    p = pool @ h
    z = jnp.maximum(p, 0.0)
    w1, b1, w2, b2 = params
    z1 = jnp.maximum(z @ w1 + b1, 0.0)
    return z1 @ w2 + b2


if __name__ == "__main__":
    # Small shapes consistent with the module's forward.
    N = 16          # nodes
    E = 40          # edges
    C = 32          # hidden_graph_channels
    H = 10          # hidden_lin_channels (module default)
    G = 2           # graphs in batch

    key = jax.random.PRNGKey(0)
    kx, ke, kw, k1, k2, k3, k4 = jax.random.split(key, 7)

    x = jax.random.normal(kx, (N, C), jnp.float32)
    edge_index = jax.random.randint(ke, (2, E), 0, N, dtype=jnp.int32)
    edge_attr = jax.random.uniform(kw, (E,), jnp.float32)
    batch = jnp.concatenate(
        [jnp.zeros((N // 2,), jnp.int32), jnp.ones((N - N // 2,), jnp.int32)]
    )

    # Deterministic parameter init mimicking nn.Linear (uniform +-1/sqrt(fan_in)).
    lim1 = 1.0 / jnp.sqrt(jnp.float32(C))
    lim2 = 1.0 / jnp.sqrt(jnp.float32(H))
    w1 = jax.random.uniform(k1, (C, H), jnp.float32, -lim1, lim1)
    b1 = jax.random.uniform(k2, (1, H), jnp.float32, -lim1, lim1)
    w2 = jax.random.uniform(k3, (H, 1), jnp.float32, -lim2, lim2)
    b2 = jax.random.uniform(k4, (1, 1), jnp.float32, -lim2, lim2)
    params = (w1, b1, w2, b2)

    out = gcnnet_forward(x, edge_index, edge_attr, batch, params, G)
    out = jax.block_until_ready(out)

    ref = reference_forward(x, edge_index, edge_attr, batch, params, G)
    assert out.shape == (G, 1)
    # bf16 adjacency / features on the MXU (f32 accumulate) -> loosened tolerance.
    assert jnp.allclose(out, ref, atol=5e-2, rtol=5e-2), (out, ref)

    print("KERNEL_OK")
</pallas_src>

<mosaic_0001>
module attributes {stable_mosaic.version = 11 : i64} {
  func.func @gcn_kernel(%arg0: i32, %arg1: i32, %arg2: memref<8x128xbf16, #tpu.memory_space<vmem>>, %arg3: memref<128x128xbf16, #tpu.memory_space<vmem>>, %arg4: memref<128x128xbf16, #tpu.memory_space<vmem>>, %arg5: memref<8x1xf32, #tpu.memory_space<vmem>>, %arg6: memref<128x128xf32, #tpu.memory_space<vmem>>, %arg7: memref<1x128xf32, #tpu.memory_space<vmem>>, %arg8: memref<128x128xf32, #tpu.memory_space<vmem>>, %arg9: memref<1x128xf32, #tpu.memory_space<vmem>>, %arg10: memref<8x128xf32, #tpu.memory_space<vmem>>, %arg11: memref<8x128xf32, #tpu.memory_space<vmem>>) attributes {dimension_semantics = [#tpu.dimension_semantics<arbitrary>, #tpu.dimension_semantics<arbitrary>], iteration_bounds = array<i64: 1, 1>, scalar_prefetch = 0 : i64, scratch_operands = 1 : i64, tpu.core_type = #tpu.core_type<tc>, window_params = [{transform_indices = @transform_0, window_bounds = array<i64: 8, 128>}, {transform_indices = @transform_1, window_bounds = array<i64: 128, 128>}, {transform_indices = @transform_2, window_bounds = array<i64: 128, 128>}, {pipeline_mode = #tpu.pipeline_mode<synchronous>, transform_indices = @transform_3, window_bounds = array<i64: 8, 1>}, {pipeline_mode = #tpu.pipeline_mode<synchronous>, transform_indices = @transform_4, window_bounds = array<i64: 128, 128>}, {pipeline_mode = #tpu.pipeline_mode<synchronous>, transform_indices = @transform_5, window_bounds = array<i64: 1, 128>}, {pipeline_mode = #tpu.pipeline_mode<synchronous>, transform_indices = @transform_6, window_bounds = array<i64: 128, 128>}, {pipeline_mode = #tpu.pipeline_mode<synchronous>, transform_indices = @transform_7, window_bounds = array<i64: 1, 128>}, {pipeline_mode = #tpu.pipeline_mode<synchronous>, transform_indices = @transform_8, window_bounds = array<i64: 8, 128>}]} {
    %c0_i32 = arith.constant 0 : i32
    %0 = arith.cmpi eq, %arg0, %c0_i32 : i32
    %c0_i32_0 = arith.constant 0 : i32
    %1 = arith.cmpi eq, %arg1, %c0_i32_0 : i32
    %2 = arith.andi %0, %1 : i1
    %3 = arith.extui %2 : i1 to i32
    %c0_i32_1 = arith.constant 0 : i32
    %4 = arith.cmpi ne, %3, %c0_i32_1 : i32
    scf.if %4 {
      %cst_15 = arith.constant 0.000000e+00 : f32
      %19 = vector.broadcast %cst_15 : f32 to vector<8x128xf32>
      %c0_16 = arith.constant 0 : index
      %c0_17 = arith.constant 0 : index
      %20 = vector.load %arg11[%c0_16, %c0_17] : memref<8x128xf32, #tpu.memory_space<vmem>>, vector<8x128xf32>
      tpu.vector_store %arg11[%c0_16, %c0_17], %19 {strides = array<i32>} : memref<8x128xf32, #tpu.memory_space<vmem>>, vector<8x128xf32>,
    } else {
    }
    %c0 = arith.constant 0 : index
    %c0_2 = arith.constant 0 : index
    %5 = vector.load %arg2[%c0, %c0_2] : memref<8x128xbf16, #tpu.memory_space<vmem>>, vector<8x128xbf16>
    %c0_3 = arith.constant 0 : index
    %c0_4 = arith.constant 0 : index
    %6 = vector.load %arg3[%c0_3, %c0_4] : memref<128x128xbf16, #tpu.memory_space<vmem>>, vector<128x128xbf16>
    %cst = arith.constant dense<0.000000e+00> : vector<8x128xf32>
    %7 = tpu.matmul %5, %6, %cst {dimension_numbers = #tpu.dot_dimension_numbers<[1], [0], [0], [1], [0, 0, 1, 1], [], []>} : vector<8x128xbf16>, vector<128x128xbf16>, vector<8x128xf32> -> vector<8x128xf32>
    %c0_5 = arith.constant 0 : index
    %c0_6 = arith.constant 0 : index
    %8 = vector.load %arg11[%c0_5, %c0_6] : memref<8x128xf32, #tpu.memory_space<vmem>>, vector<8x128xf32>
    %9 = arith.truncf %7 : vector<8x128xf32> to vector<8x128xbf16>
    %c0_7 = arith.constant 0 : index
    %c0_8 = arith.constant 0 : index
    %10 = vector.load %arg4[%c0_7, %c0_8] : memref<128x128xbf16, #tpu.memory_space<vmem>>, vector<128x128xbf16>
    %cst_9 = arith.constant dense<0.000000e+00> : vector<8x128xf32>
    %11 = tpu.matmul %9, %10, %cst_9 {dimension_numbers = #tpu.dot_dimension_numbers<[1], [0], [0], [1], [0, 0, 1, 1], [], []>} : vector<8x128xbf16>, vector<128x128xbf16>, vector<8x128xf32> -> vector<8x128xf32>
    %12 = arith.addf %8, %11 : vector<8x128xf32>
    %c0_10 = arith.constant 0 : index
    %c0_11 = arith.constant 0 : index
    %13 = vector.load %arg11[%c0_10, %c0_11] : memref<8x128xf32, #tpu.memory_space<vmem>>, vector<8x128xf32>
    tpu.vector_store %arg11[%c0_10, %c0_11], %12 {strides = array<i32>} : memref<8x128xf32, #tpu.memory_space<vmem>>, vector<8x128xf32>,
    %c0_i32_12 = arith.constant 0 : i32
    %14 = arith.cmpi eq, %arg0, %c0_i32_12 : i32
    %c0_i32_13 = arith.constant 0 : i32
    %15 = arith.cmpi eq, %arg1, %c0_i32_13 : i32
    %16 = arith.andi %14, %15 : i1
    %17 = arith.extui %16 : i1 to i32
    %c0_i32_14 = arith.constant 0 : i32
    %18 = arith.cmpi ne, %17, %c0_i32_14 : i32
    scf.if %18 {
      %c0_15 = arith.constant 0 : index
      %c0_16 = arith.constant 0 : index
      %19 = vector.load %arg11[%c0_15, %c0_16] : memref<8x128xf32, #tpu.memory_space<vmem>>, vector<8x128xf32>
      %c0_17 = arith.constant 0 : index
      %c0_18 = arith.constant 0 : index
      %20 = vector.load %arg5[%c0_17, %c0_18] : memref<8x1xf32, #tpu.memory_space<vmem>>, vector<8x1xf32>
      %21 = vector.broadcast %20 : vector<8x1xf32> to vector<8x128xf32>
      %22 = arith.mulf %19, %21 : vector<8x128xf32>
      %cst_19 = arith.constant 0.000000e+00 : f32
      %23 = vector.broadcast %cst_19 : f32 to vector<8x128xf32>
      %24 = arith.maximumf %22, %23 : vector<8x128xf32>
      %c0_20 = arith.constant 0 : index
      %c0_21 = arith.constant 0 : index
      %25 = vector.load %arg6[%c0_20, %c0_21] : memref<128x128xf32, #tpu.memory_space<vmem>>, vector<128x128xf32>
      %cst_22 = arith.constant dense<0.000000e+00> : vector<8x128xf32>
      %26 = tpu.matmul %24, %25, %cst_22 {dimension_numbers = #tpu.dot_dimension_numbers<[1], [0], [0], [1], [0, 0, 1, 1], [], []>} : vector<8x128xf32>, vector<128x128xf32>, vector<8x128xf32> -> vector<8x128xf32>
      %c0_23 = arith.constant 0 : index
      %c0_24 = arith.constant 0 : index
      %27 = vector.load %arg7[%c0_23, %c0_24] : memref<1x128xf32, #tpu.memory_space<vmem>>, vector<1x128xf32>
      %28 = vector.broadcast %27 : vector<1x128xf32> to vector<8x128xf32>
      %29 = arith.addf %26, %28 : vector<8x128xf32>
      %cst_25 = arith.constant 0.000000e+00 : f32
      %30 = vector.broadcast %cst_25 : f32 to vector<8x128xf32>
      %31 = arith.maximumf %29, %30 : vector<8x128xf32>
      %c0_26 = arith.constant 0 : index
      %c0_27 = arith.constant 0 : index
      %32 = vector.load %arg8[%c0_26, %c0_27] : memref<128x128xf32, #tpu.memory_space<vmem>>, vector<128x128xf32>
      %cst_28 = arith.constant dense<0.000000e+00> : vector<8x128xf32>
      %33 = tpu.matmul %31, %32, %cst_28 {dimension_numbers = #tpu.dot_dimension_numbers<[1], [0], [0], [1], [0, 0, 1, 1], [], []>} : vector<8x128xf32>, vector<128x128xf32>, vector<8x128xf32> -> vector<8x128xf32>
      %c0_29 = arith.constant 0 : index
      %c0_30 = arith.constant 0 : index
      %34 = vector.load %arg9[%c0_29, %c0_30] : memref<1x128xf32, #tpu.memory_space<vmem>>, vector<1x128xf32>
      %35 = vector.broadcast %34 : vector<1x128xf32> to vector<8x128xf32>
      %36 = arith.addf %33, %35 : vector<8x128xf32>
      %c0_31 = arith.constant 0 : index
      %c0_32 = arith.constant 0 : index
      %37 = vector.load %arg10[%c0_31, %c0_32] : memref<8x128xf32, #tpu.memory_space<vmem>>, vector<8x128xf32>
      tpu.vector_store %arg10[%c0_31, %c0_32], %36 {strides = array<i32>} : memref<8x128xf32, #tpu.memory_space<vmem>>, vector<8x128xf32>,
    } else {
    }
    return
  }
  func.func @transform_0(%arg0: i32, %arg1: i32) -> (i32, i32) {
    %c0_i32 = arith.constant 0 : i32
    %c0_i32_0 = arith.constant 0 : i32
    return %c0_i32, %arg1 : i32, i32
  }
  func.func @transform_1(%arg0: i32, %arg1: i32) -> (i32, i32) {
    %c0_i32 = arith.constant 0 : i32
    return %arg1, %arg0 : i32, i32
  }
  func.func @transform_2(%arg0: i32, %arg1: i32) -> (i32, i32) {
    %c0_i32 = arith.constant 0 : i32
    %c0_i32_0 = arith.constant 0 : i32
    return %arg0, %c0_i32 : i32, i32
  }
  func.func @transform_3(%arg0: i32, %arg1: i32) -> (i32, i32) {
    %c0_i32 = arith.constant 0 : i32
    %c0_i32_0 = arith.constant 0 : i32
    %c0_i32_1 = arith.constant 0 : i32
    return %c0_i32, %c0_i32_0 : i32, i32
  }
  func.func @transform_4(%arg0: i32, %arg1: i32) -> (i32, i32) {
    %c0_i32 = arith.constant 0 : i32
    %c0_i32_0 = arith.constant 0 : i32
    %c0_i32_1 = arith.constant 0 : i32
    return %c0_i32, %c0_i32_0 : i32, i32
  }
  func.func @transform_5(%arg0: i32, %arg1: i32) -> (i32, i32) {
    %c0_i32 = arith.constant 0 : i32
    %c0_i32_0 = arith.constant 0 : i32
    %c0_i32_1 = arith.constant 0 : i32
    return %c0_i32, %c0_i32_0 : i32, i32
  }
  func.func @transform_6(%arg0: i32, %arg1: i32) -> (i32, i32) {
    %c0_i32 = arith.constant 0 : i32
    %c0_i32_0 = arith.constant 0 : i32
    %c0_i32_1 = arith.constant 0 : i32
    return %c0_i32, %c0_i32_0 : i32, i32
  }
  func.func @transform_7(%arg0: i32, %arg1: i32) -> (i32, i32) {
    %c0_i32 = arith.constant 0 : i32
    %c0_i32_0 = arith.constant 0 : i32
    %c0_i32_1 = arith.constant 0 : i32
    return %c0_i32, %c0_i32_0 : i32, i32
  }
  func.func @transform_8(%arg0: i32, %arg1: i32) -> (i32, i32) {
    %c0_i32 = arith.constant 0 : i32
    %c0_i32_0 = arith.constant 0 : i32
    %c0_i32_1 = arith.constant 0 : i32
    return %c0_i32, %c0_i32_0 : i32, i32
  }
}

</mosaic_0001>

<llo_original>
// kernel: tpu_custom_call.1
$region0: #{tpu_custom_call.1}
  #allocation0 [shape = 'u32[]', space=smem, size = 0x4, offset = 0x4, fixed_abs, tag = 'smem constant byte address 0x4 - core index']
  #allocation1 [shape = 'u32[144,128]{1,0:T(1,128)}', space=vmem, size = 0x12000, scoped, tag = 'internal scratch']
  #allocation2 [shape = 'f32[8,128]{1,0:T(8,128)}', space=vmem, size = 0x1000, scoped, tag = 'scratch operand']
  %s0 = inlined_call_operand.vmem [shape: bf16[8,128], index: 0, kind: input, shape index: {}]
  %s1 = inlined_call_operand.hbm [shape: bf16[128,128], index: 1, kind: input, shape index: {}]
  %s2 = inlined_call_operand.hbm [shape: bf16[128,128], index: 2, kind: input, shape index: {}]
  %s3 = inlined_call_operand.vmem [shape: f32[8,1], index: 3, kind: input, shape index: {}]
  %s4 = inlined_call_operand.hbm [shape: f32[128,128], index: 4, kind: input, shape index: {}]
  %s5 = inlined_call_operand.vmem [shape: f32[1,128], index: 5, kind: input, shape index: {}]
  %s6 = inlined_call_operand.hbm [shape: f32[128,128], index: 6, kind: input, shape index: {}]
  %s7 = inlined_call_operand.vmem [shape: f32[1,128], index: 7, kind: input, shape index: {}]
  %s8 = inlined_call_operand.hbm [shape: f32[8,128], index: 8, kind: output, shape index: {}]
  %s9 = sld [smem:[#allocation0]]
  $region66: #{tpu_custom_call.1} parent=0
    _
  %s11 = ssub.s32 1, %s9
  %s12 = scalar_select 0, %s11, %s9
  $region1: #{tpu_custom_call.1} parent=0
    #allocation3 [shape = 'u8[32768]{0}', space=vmem, size = 0x8000, scoped, tag = 'input window, operand 1, single buffered']
    #allocation4 [shape = 's32[1]{0}', space=sflag, size = 0x4, scoped, tag = 'scoped memory for tpu_custom_call.1']
    #allocation5 [shape = 's32[1]{0}', space=sflag, size = 0x4, scoped, tag = 'scoped memory for tpu_custom_call.1']
    #allocation6 [shape = 'u8[32768]{0}', space=vmem, size = 0x8000, scoped, tag = 'input window, operand 2, single buffered']
    #allocation7 [shape = 's32[1]{0}', space=sflag, size = 0x4, scoped, tag = 'scoped memory for tpu_custom_call.1']
    #allocation8 [shape = 'u8[65536]{0}', space=vmem, size = 0x10000, scoped, tag = 'input window, operand 4, single buffered']
    #allocation9 [shape = 'u8[65536]{0}', space=vmem, size = 0x10000, scoped, tag = 'input window, operand 6, single buffered']
    #allocation10 [shape = 's32[1]{0}', space=sflag, size = 0x4, scoped, tag = 'scoped memory for tpu_custom_call.1']
    #allocation11 [shape = 'u8[4096]{0}', space=vmem, size = 0x1000, scoped, tag = 'output window, operand 0, single buffered']
    %13 = vsyncpa [#allocation4], 0
    %14 = vsyncpa [#allocation7], 0
    %15 = vsyncpa [#allocation10], 0
    %16 = vsyncpa [#allocation5], 0
    // Predicated region
    $region2: #{tpu_custom_call.1} parent=1 // pred_check
      _
    $region3: #{tpu_custom_call.1} parent=1 // pred_check_branch
      %18 = sbr.rel (0) target = $region5
    $region4: #{tpu_custom_call.1} parent=1 // pred_region
      _
    $region5: #{tpu_custom_call.1} parent=1 // pred_fallthru
      _
    // Predicated region
    $region6: #{tpu_custom_call.1} parent=1 // pred_check
      _
    $region7: #{tpu_custom_call.1} parent=1 // pred_check_branch
      %20 = sbr.rel (0) target = $region9
    $region8: #{tpu_custom_call.1} parent=1 // pred_region
      %s22 = ssub.s32 1024, 1024
      %23 = vsyncadd [#allocation4], %s22
      %s24 = sshll.u32 [#allocation3], 4
      %s25 = int_to_ptr.vmem [resolvable:$true] %s24
      %30 = dma.hbm_to_vmem [thread:$0]  %s1, 1024, %s25, [#allocation4], 64, 64, 4
    $region9: #{tpu_custom_call.1} parent=1 // pred_fallthru
      _
    // Predicated region
    $region10: #{tpu_custom_call.1} parent=1 // pred_check
      _
    $region11: #{tpu_custom_call.1} parent=1 // pred_check_branch
      %32 = sbr.rel (0) target = $region13
    $region12: #{tpu_custom_call.1} parent=1 // pred_region
      %s34 = ssub.s32 1024, 1024
      %35 = vsyncadd [#allocation7], %s34
      %s36 = sshll.u32 [#allocation6], 4
      %s37 = int_to_ptr.vmem [resolvable:$true] %s36
      %42 = dma.hbm_to_vmem [thread:$0]  %s2, 1024, %s37, [#allocation7], 64, 64, 4
    $region13: #{tpu_custom_call.1} parent=1 // pred_fallthru
      _
    // Predicated region
    $region14: #{tpu_custom_call.1} parent=1 // pred_check
      _
    $region15: #{tpu_custom_call.1} parent=1 // pred_check_branch
      %44 = sbr.rel (0) target = $region17
    $region16: #{tpu_custom_call.1} parent=1 // pred_region
      _
    $region17: #{tpu_custom_call.1} parent=1 // pred_fallthru
      _
    // Predicated region
    $region18: #{tpu_custom_call.1} parent=1 // pred_check
      _
    $region19: #{tpu_custom_call.1} parent=1 // pred_check_branch
      %46 = sbr.rel (0) target = $region21
    $region20: #{tpu_custom_call.1} parent=1 // pred_region
      %s48 = ssub.s32 2048, 2048
      %49 = vsyncadd [#allocation7], %s48
      %s50 = sshll.u32 [#allocation8], 4
      %s51 = int_to_ptr.vmem [resolvable:$true] %s50
      %56 = dma.hbm_to_vmem [thread:$0]  %s4, 2048, %s51, [#allocation7], 128, 128, 8
    $region21: #{tpu_custom_call.1} parent=1 // pred_fallthru
      _
    // Predicated region
    $region22: #{tpu_custom_call.1} parent=1 // pred_check
      _
    $region23: #{tpu_custom_call.1} parent=1 // pred_check_branch
      %58 = sbr.rel (0) target = $region25
    $region24: #{tpu_custom_call.1} parent=1 // pred_region
      _
    $region25: #{tpu_custom_call.1} parent=1 // pred_fallthru
      _
    // Predicated region
    $region26: #{tpu_custom_call.1} parent=1 // pred_check
      _
    $region27: #{tpu_custom_call.1} parent=1 // pred_check_branch
      %60 = sbr.rel (0) target = $region29
    $region28: #{tpu_custom_call.1} parent=1 // pred_region
      %s62 = ssub.s32 2048, 2048
      %63 = vsyncadd [#allocation10], %s62
      %s64 = sshll.u32 [#allocation9], 4
      %s65 = int_to_ptr.vmem [resolvable:$true] %s64
      %70 = dma.hbm_to_vmem [thread:$0]  %s6, 2048, %s65, [#allocation10], 128, 128, 8
    $region29: #{tpu_custom_call.1} parent=1 // pred_fallthru
      _
    // Predicated region
    $region30: #{tpu_custom_call.1} parent=1 // pred_check
      _
    $region31: #{tpu_custom_call.1} parent=1 // pred_check_branch
      %72 = sbr.rel (0) target = $region33
    $region32: #{tpu_custom_call.1} parent=1 // pred_region
      _
    $region33: #{tpu_custom_call.1} parent=1 // pred_fallthru
      _
    // Predicated region
    $region34: #{tpu_custom_call.1} parent=1 // pred_check
      _
    $region35: #{tpu_custom_call.1} parent=1 // pred_check_branch
      %74 = sbr.rel (0) target = $region37
    $region36: #{tpu_custom_call.1} parent=1 // pred_region
      %75 = dma.done [#allocation4], 1024
    $region37: #{tpu_custom_call.1} parent=1 // pred_fallthru
      _
    // Predicated region
    $region38: #{tpu_custom_call.1} parent=1 // pred_check
      _
    $region39: #{tpu_custom_call.1} parent=1 // pred_check_branch
      %77 = sbr.rel (0) target = $region41
    $region40: #{tpu_custom_call.1} parent=1 // pred_region
      %78 = dma.done [#allocation7], 1024
    $region41: #{tpu_custom_call.1} parent=1 // pred_fallthru
      _
    // Predicated region
    $region42: #{tpu_custom_call.1} parent=1 // pred_check
      _
    $region43: #{tpu_custom_call.1} parent=1 // pred_check_branch
      %80 = sbr.rel (0) target = $region45
    $region44: #{tpu_custom_call.1} parent=1 // pred_region
      %81 = dma.done [#allocation7], 2048
    $region45: #{tpu_custom_call.1} parent=1 // pred_fallthru
      _
    // Predicated region
    $region46: #{tpu_custom_call.1} parent=1 // pred_check
      _
    $region47: #{tpu_custom_call.1} parent=1 // pred_check_branch
      %83 = sbr.rel (0) target = $region49
    $region48: #{tpu_custom_call.1} parent=1 // pred_region
      %84 = dma.done [#allocation10], 2048
    $region49: #{tpu_custom_call.1} parent=1 // pred_fallthru
      _
    %p86 = scmp.eq.s32.totalorder 0, 0
    %p87 = scmp.eq.s32.totalorder 0, 0
    %p88 = pnand %p86, %p87
    %p89 = pneg %p88
    // Predicated region
    $region50: #{tpu_custom_call.1} parent=1 // pred_check
      _
    $region51: #{tpu_custom_call.1} parent=1 // pred_check_branch
      %91 = sbr.rel (%p88) target = $region53
    $region52: #{tpu_custom_call.1} parent=1 // pred_region
      %92 = vst [vmem:[#allocation2] sm:$0xff] 0.0
    $region53: #{tpu_custom_call.1} parent=1 // pred_fallthru
      _
    %v93 = vld [vmem:[%s0] sm:$0xf]
    %v94 = vld [vmem:[#allocation3] sm:$0xf]
    %v95 = vld [vmem:[#allocation3 + $0x4] sm:$0xf]
    %v96 = vld [vmem:[#allocation3 + $0x8] sm:$0xf]
    %v97 = vld [vmem:[#allocation3 + $0xc] sm:$0xf]
    %v98 = vld [vmem:[#allocation3 + $0x10] sm:$0xf]
    %v99 = vld [vmem:[#allocation3 + $0x14] sm:$0xf]
    %v100 = vld [vmem:[#allocation3 + $0x18] sm:$0xf]
    %v101 = vld [vmem:[#allocation3 + $0x1c] sm:$0xf]
    %v102 = vld [vmem:[#allocation3 + $0x20] sm:$0xf]
    %v103 = vld [vmem:[#allocation3 + $0x24] sm:$0xf]
    %v104 = vld [vmem:[#allocation3 + $0x28] sm:$0xf]
    %v105 = vld [vmem:[#allocation3 + $0x2c] sm:$0xf]
    %v106 = vld [vmem:[#allocation3 + $0x30] sm:$0xf]
    %v107 = vld [vmem:[#allocation3 + $0x34] sm:$0xf]
    %v108 = vld [vmem:[#allocation3 + $0x38] sm:$0xf]
    %v109 = vld [vmem:[#allocation3 + $0x3c] sm:$0xf]
    %v126 = vunpack.c.l.b16 %v94
    %v127 = vunpack.c.l.b16 %v95
    %v128 = vunpack.c.l.b16 %v96
    %v129 = vunpack.c.l.b16 %v97
    %v130 = vunpack.c.l.b16 %v98
    %v131 = vunpack.c.l.b16 %v99
    %v132 = vunpack.c.l.b16 %v100
    %v133 = vunpack.c.l.b16 %v101
    %v134 = vunpack.c.l.b16 %v102
    %v135 = vunpack.c.l.b16 %v103
    %v136 = vunpack.c.l.b16 %v104
    %v137 = vunpack.c.l.b16 %v105
    %v138 = vunpack.c.l.b16 %v106
    %v139 = vunpack.c.l.b16 %v107
    %v140 = vunpack.c.l.b16 %v108
    %v141 = vunpack.c.l.b16 %v109
    %v142 = vpack.c.b16 %v127, %v126
    %v143 = vpack.c.b16 %v129, %v128
    %v144 = vpack.c.b16 %v131, %v130
    %v145 = vpack.c.b16 %v133, %v132
    %v146 = vpack.c.b16 %v135, %v134
    %v147 = vpack.c.b16 %v137, %v136
    %v148 = vpack.c.b16 %v139, %v138
    %v149 = vpack.c.b16 %v141, %v140
    %158 = vmatprep.subr.bf16.mxu0 0
    %159 = vmatpush1.bf16.msra.mxu0 %v142
    %160 = vmatprep.subr.bf16.mxu0 0
    %161 = vmatpush1.bf16.msra.mxu0 %v143
    %162 = vmatprep.subr.bf16.mxu0 0
    %163 = vmatpush1.bf16.msra.mxu0 %v144
    %164 = vmatprep.subr.bf16.mxu0 0
    %165 = vmatpush1.bf16.msra.mxu0 %v145
    %166 = vmatprep.subr.bf16.mxu0 0
    %167 = vmatpush1.bf16.msra.mxu0 %v146
    %168 = vmatprep.subr.bf16.mxu0 0
    %169 = vmatpush1.bf16.msra.mxu0 %v147
    %170 = vmatprep.subr.bf16.mxu0 0
    %171 = vmatpush1.bf16.msra.mxu0 %v148
    %172 = vmatprep.subr.bf16.mxu0 0
    %173 = vmatpush1.bf16.msra.mxu0 %v149
    %174 = vmatprep.subr.bf16.mxu0 0
    %175 = vmatpush1.bf16.msra.mxu0 0
    %176 = vmatprep.subr.bf16.mxu0 0
    %177 = vmatpush1.bf16.msra.mxu0 0
    %178 = vmatprep.subr.bf16.mxu0 0
    %179 = vmatpush1.bf16.msra.mxu0 0
    %180 = vmatprep.subr.bf16.mxu0 0
    %181 = vmatpush1.bf16.msra.mxu0 0
    %182 = vmatprep.subr.bf16.mxu0 0
    %183 = vmatpush1.bf16.msra.mxu0 0
    %184 = vmatprep.subr.bf16.mxu0 0
    %185 = vmatpush1.bf16.msra.mxu0 0
    %186 = vmatprep.subr.bf16.mxu0 0
    %187 = vmatpush1.bf16.msra.mxu0 0
    %188 = vmatprep.subr.bf16.mxu0 0
    %189 = vmatpush1.bf16.msra.mxu0 0
    %190 = vmatprep.mubr.bf16.mxu0 0
    %191 = vmatmul.mubr.bf16.gmra.mrb[0].mxu0 %v93
    %v192 = vpop.f32.mrb[0].mxu0
    %v193 = vadd.f32 0.0, %v192
    %v194 = vpop.f32.mrb[0].mxu0
    %v195 = vpop.f32.mrb[0].mxu0
    %v196 = vpop.f32.mrb[0].mxu0
    %197 = vdwg.mxu0
    %v198 = vld [vmem:[#allocation2] sm:$0xff]
    %v199 = vpack.c.bf16 %v193, %v193
    %v200 = vld [vmem:[#allocation6] sm:$0xf]
    %v201 = vld [vmem:[#allocation6 + $0x4] sm:$0xf]
    %v202 = vld [vmem:[#allocation6 + $0x8] sm:$0xf]
    %v203 = vld [vmem:[#allocation6 + $0xc] sm:$0xf]
    %v204 = vld [vmem:[#allocation6 + $0x10] sm:$0xf]
    %v205 = vld [vmem:[#allocation6 + $0x14] sm:$0xf]
    %v206 = vld [vmem:[#allocation6 + $0x18] sm:$0xf]
    %v207 = vld [vmem:[#allocation6 + $0x1c] sm:$0xf]
    %v208 = vld [vmem:[#allocation6 + $0x20] sm:$0xf]
    %v209 = vld [vmem:[#allocation6 + $0x24] sm:$0xf]
    %v210 = vld [vmem:[#allocation6 + $0x28] sm:$0xf]
    %v211 = vld [vmem:[#allocation6 + $0x2c] sm:$0xf]
    %v212 = vld [vmem:[#allocation6 + $0x30] sm:$0xf]
    %v213 = vld [vmem:[#allocation6 + $0x34] sm:$0xf]
    %v214 = vld [vmem:[#allocation6 + $0x38] sm:$0xf]
    %v215 = vld [vmem:[#allocation6 + $0x3c] sm:$0xf]
    %v232 = vunpack.c.l.b16 %v200
    %v233 = vunpack.c.l.b16 %v201
    %v234 = vunpack.c.l.b16 %v202
    %v235 = vunpack.c.l.b16 %v203
    %v236 = vunpack.c.l.b16 %v204
    %v237 = vunpack.c.l.b16 %v205
    %v238 = vunpack.c.l.b16 %v206
    %v239 = vunpack.c.l.b16 %v207
    %v240 = vunpack.c.l.b16 %v208
    %v241 = vunpack.c.l.b16 %v209
    %v242 = vunpack.c.l.b16 %v210
    %v243 = vunpack.c.l.b16 %v211
    %v244 = vunpack.c.l.b16 %v212
    %v245 = vunpack.c.l.b16 %v213
    %v246 = vunpack.c.l.b16 %v214
    %v247 = vunpack.c.l.b16 %v215
    %v248 = vpack.c.b16 %v233, %v232
    %v249 = vpack.c.b16 %v235, %v234
    %v250 = vpack.c.b16 %v237, %v236
    %v251 = vpack.c.b16 %v239, %v238
    %v252 = vpack.c.b16 %v241, %v240
    %v253 = vpack.c.b16 %v243, %v242
    %v254 = vpack.c.b16 %v245, %v244
    %v255 = vpack.c.b16 %v247, %v246
    %264 = vmatprep.subr.bf16.mxu0 0
    %265 = vmatpush1.bf16.msra.mxu0 %v248
    %266 = vmatprep.subr.bf16.mxu0 0
    %267 = vmatpush1.bf16.msra.mxu0 %v249
    %268 = vmatprep.subr.bf16.mxu0 0
    %269 = vmatpush1.bf16.msra.mxu0 %v250
    %270 = vmatprep.subr.bf16.mxu0 0
    %271 = vmatpush1.bf16.msra.mxu0 %v251
    %272 = vmatprep.subr.bf16.mxu0 0
    %273 = vmatpush1.bf16.msra.mxu0 %v252
    %274 = vmatprep.subr.bf16.mxu0 0
    %275 = vmatpush1.bf16.msra.mxu0 %v253
    %276 = vmatprep.subr.bf16.mxu0 0
    %277 = vmatpush1.bf16.msra.mxu0 %v254
    %278 = vmatprep.subr.bf16.mxu0 0
    %279 = vmatpush1.bf16.msra.mxu0 %v255
    %280 = vmatprep.subr.bf16.mxu0 0
    %281 = vmatpush1.bf16.msra.mxu0 0
    %282 = vmatprep.subr.bf16.mxu0 0
    %283 = vmatpush1.bf16.msra.mxu0 0
    %284 = vmatprep.subr.bf16.mxu0 0
    %285 = vmatpush1.bf16.msra.mxu0 0
    %286 = vmatprep.subr.bf16.mxu0 0
    %287 = vmatpush1.bf16.msra.mxu0 0
    %288 = vmatprep.subr.bf16.mxu0 0
    %289 = vmatpush1.bf16.msra.mxu0 0
    %290 = vmatprep.subr.bf16.mxu0 0
    %291 = vmatpush1.bf16.msra.mxu0 0
    %292 = vmatprep.subr.bf16.mxu0 0
    %293 = vmatpush1.bf16.msra.mxu0 0
    %294 = vmatprep.subr.bf16.mxu0 0
    %295 = vmatpush1.bf16.msra.mxu0 0
    %296 = vmatprep.mubr.bf16.mxu0 0
    %297 = vmatmul.mubr.bf16.gmra.mrb[0].mxu0 %v199
    %v298 = vpop.f32.mrb[0].mxu0
    %v299 = vadd.f32 0.0, %v298
    %v300 = vpop.f32.mrb[0].mxu0
    %v301 = vpop.f32.mrb[0].mxu0
    %v302 = vpop.f32.mrb[0].mxu0
    %303 = vdwg.mxu0
    %v304 = vadd.f32 %v198, %v299
    %305 = vst [vmem:[#allocation2] sm:$0xff] %v304
    // Predicated region
    $region54: #{tpu_custom_call.1} parent=1 // pred_check
      _
    $region55: #{tpu_custom_call.1} parent=1 // pred_check_branch
      %307 = sbr.rel (%p88) target = $region57
    $region56: #{tpu_custom_call.1} parent=1 // pred_region
      %v308 = vld [vmem:[#allocation2] sm:$0xff]
      %v309 = vld [vmem:[%s3] sm:$0xff]
      %311 = vset.pattern.permute.xlu0 0
      %312 = vperm.xlu0 %311, %v309
      %v313 = vpop.permute.xlu0 %312
      %v315 = vmul.f32 %v308, %v313
      %v316 = vmax.f32 %v315, 0.0
      %v317 = vld [vmem:[#allocation8] sm:$0xff]
      %v318 = vld [vmem:[#allocation8 + $0x8] sm:$0xff]
      %v319 = vld [vmem:[#allocation8 + $0x10] sm:$0xff]
      %v320 = vld [vmem:[#allocation8 + $0x18] sm:$0xff]
      %v321 = vld [vmem:[#allocation8 + $0x20] sm:$0xff]
      %v322 = vld [vmem:[#allocation8 + $0x28] sm:$0xff]
      %v323 = vld [vmem:[#allocation8 + $0x30] sm:$0xff]
      %v324 = vld [vmem:[#allocation8 + $0x38] sm:$0xff]
      %v325 = vld [vmem:[#allocation8 + $0x40] sm:$0xff]
      %v326 = vld [vmem:[#allocation8 + $0x48] sm:$0xff]
      %v327 = vld [vmem:[#allocation8 + $0x50] sm:$0xff]
      %v328 = vld [vmem:[#allocation8 + $0x58] sm:$0xff]
      %v329 = vld [vmem:[#allocation8 + $0x60] sm:$0xff]
      %v330 = vld [vmem:[#allocation8 + $0x68] sm:$0xff]
      %v331 = vld [vmem:[#allocation8 + $0x70] sm:$0xff]
      %v332 = vld [vmem:[#allocation8 + $0x78] sm:$0xff]
      %v333 = vld [vmem:[%s5] sm:$0x1]
      %v335 = vlaneseq
      %v336 = vshrl.u32 %v335, 7
      %v337 = vsub.s32 0, %v336
      %v338 = vrot.slane %v333, %v337
      %340 = vmatprep.subr.mxu0 0.0
      %341 = vmatpush1.msra.mxu0 %v317
      %342 = vmatprep.subr.mxu0 0.0
      %343 = vmatpush1.msra.mxu0 %v318
      %344 = vmatprep.subr.mxu0 0.0
      %345 = vmatpush1.msra.mxu0 %v319
      %346 = vmatprep.subr.mxu0 0.0
      %347 = vmatpush1.msra.mxu0 %v320
      %348 = vmatprep.subr.mxu0 0.0
      %349 = vmatpush1.msra.mxu0 %v321
      %350 = vmatprep.subr.mxu0 0.0
      %351 = vmatpush1.msra.mxu0 %v322
      %352 = vmatprep.subr.mxu0 0.0
      %353 = vmatpush1.msra.mxu0 %v323
      %354 = vmatprep.subr.mxu0 0.0
      %355 = vmatpush1.msra.mxu0 %v324
      %356 = vmatprep.subr.mxu0 0.0
      %357 = vmatpush1.msra.mxu0 %v325
      %358 = vmatprep.subr.mxu0 0.0
      %359 = vmatpush1.msra.mxu0 %v326
      %360 = vmatprep.subr.mxu0 0.0
      %361 = vmatpush1.msra.mxu0 %v327
      %362 = vmatprep.subr.mxu0 0.0
      %363 = vmatpush1.msra.mxu0 %v328
      %364 = vmatprep.subr.mxu0 0.0
      %365 = vmatpush1.msra.mxu0 %v329
      %366 = vmatprep.subr.mxu0 0.0
      %367 = vmatpush1.msra.mxu0 %v330
      %368 = vmatprep.subr.mxu0 0.0
      %369 = vmatpush1.msra.mxu0 %v331
      %370 = vmatprep.subr.mxu0 0.0
      %371 = vmatpush1.msra.mxu0 %v332
      %372 = vmatprep.subr.mxu0 0.0
      %373 = vmatpush1.msra.mxu0 0.0
      %374 = vmatprep.subr.mxu0 0.0
      %375 = vmatpush1.msra.mxu0 0.0
      %376 = vmatprep.subr.mxu0 0.0
      %377 = vmatpush1.msra.mxu0 0.0
      %378 = vmatprep.subr.mxu0 0.0
      %379 = vmatpush1.msra.mxu0 0.0
      %380 = vmatprep.subr.mxu0 0.0
      %381 = vmatpush1.msra.mxu0 0.0
      %382 = vmatprep.subr.mxu0 0.0
      %383 = vmatpush1.msra.mxu0 0.0
      %384 = vmatprep.subr.mxu0 0.0
      %385 = vmatpush1.msra.mxu0 0.0
      %386 = vmatprep.subr.mxu0 0.0
      %387 = vmatpush1.msra.mxu0 0.0
      %388 = vmatprep.subr.mxu0 0.0
      %389 = vmatpush1.msra.mxu0 0.0
      %390 = vmatprep.subr.mxu0 0.0
      %391 = vmatpush1.msra.mxu0 0.0
      %392 = vmatprep.subr.mxu0 0.0
      %393 = vmatpush1.msra.mxu0 0.0
      %394 = vmatprep.subr.mxu0 0.0
      %395 = vmatpush1.msra.mxu0 0.0
      %396 = vmatprep.subr.mxu0 0.0
      %397 = vmatpush1.msra.mxu0 0.0
      %398 = vmatprep.subr.mxu0 0.0
      %399 = vmatpush1.msra.mxu0 0.0
      %400 = vmatprep.subr.mxu0 0.0
      %401 = vmatpush1.msra.mxu0 0.0
      %402 = vmatprep.subr.mxu0 0.0
      %403 = vmatpush1.msra.mxu0 0.0
      %404 = vmatprep.mubr.f32.mxu0 0.0
      %405 = vmatmul.mubr.f32.gmra.mrb[0].mxu0 %v316
      %v406 = vpop.f32.mrb[0].mxu0
      %v407 = vadd.f32 %v338, %v406
      %v408 = vpop.f32.mrb[0].mxu0
      %409 = vdwg.mxu0
      %v410 = vmax.f32 %v407, 0.0
      %v411 = vld [vmem:[#allocation9] sm:$0xff]
      %v412 = vld [vmem:[#allocation9 + $0x8] sm:$0xff]
      %v413 = vld [vmem:[#allocation9 + $0x10] sm:$0xff]
      %v414 = vld [vmem:[#allocation9 + $0x18] sm:$0xff]
      %v415 = vld [vmem:[#allocation9 + $0x20] sm:$0xff]
      %v416 = vld [vmem:[#allocation9 + $0x28] sm:$0xff]
      %v417 = vld [vmem:[#allocation9 + $0x30] sm:$0xff]
      %v418 = vld [vmem:[#allocation9 + $0x38] sm:$0xff]
      %v419 = vld [vmem:[#allocation9 + $0x40] sm:$0xff]
      %v420 = vld [vmem:[#allocation9 + $0x48] sm:$0xff]
      %v421 = vld [vmem:[#allocation9 + $0x50] sm:$0xff]
      %v422 = vld [vmem:[#allocation9 + $0x58] sm:$0xff]
      %v423 = vld [vmem:[#allocation9 + $0x60] sm:$0xff]
      %v424 = vld [vmem:[#allocation9 + $0x68] sm:$0xff]
      %v425 = vld [vmem:[#allocation9 + $0x70] sm:$0xff]
      %v426 = vld [vmem:[#allocation9 + $0x78] sm:$0xff]
      %v427 = vld [vmem:[%s7] sm:$0x1]
      %v429 = vlaneseq
      %v430 = vshrl.u32 %v429, 7
      %v431 = vsub.s32 0, %v430
      %v432 = vrot.slane %v427, %v431
      %434 = vmatprep.subr.mxu0 0.0
      %435 = vmatpush1.msra.mxu0 %v411
      %436 = vmatprep.subr.mxu0 0.0
      %437 = vmatpush1.msra.mxu0 %v412
      %438 = vmatprep.subr.mxu0 0.0
      %439 = vmatpush1.msra.mxu0 %v413
      %440 = vmatprep.subr.mxu0 0.0
      %441 = vmatpush1.msra.mxu0 %v414
      %442 = vmatprep.subr.mxu0 0.0
      %443 = vmatpush1.msra.mxu0 %v415
      %444 = vmatprep.subr.mxu0 0.0
      %445 = vmatpush1.msra.mxu0 %v416
      %446 = vmatprep.subr.mxu0 0.0
      %447 = vmatpush1.msra.mxu0 %v417
      %448 = vmatprep.subr.mxu0 0.0
      %449 = vmatpush1.msra.mxu0 %v418
      %450 = vmatprep.subr.mxu0 0.0
      %451 = vmatpush1.msra.mxu0 %v419
      %452 = vmatprep.subr.mxu0 0.0
      %453 = vmatpush1.msra.mxu0 %v420
      %454 = vmatprep.subr.mxu0 0.0
      %455 = vmatpush1.msra.mxu0 %v421
      %456 = vmatprep.subr.mxu0 0.0
      %457 = vmatpush1.msra.mxu0 %v422
      %458 = vmatprep.subr.mxu0 0.0
      %459 = vmatpush1.msra.mxu0 %v423
      %460 = vmatprep.subr.mxu0 0.0
      %461 = vmatpush1.msra.mxu0 %v424
      %462 = vmatprep.subr.mxu0 0.0
      %463 = vmatpush1.msra.mxu0 %v425
      %464 = vmatprep.subr.mxu0 0.0
      %465 = vmatpush1.msra.mxu0 %v426
      %466 = vmatprep.subr.mxu0 0.0
      %467 = vmatpush1.msra.mxu0 0.0
      %468 = vmatprep.subr.mxu0 0.0
      %469 = vmatpush1.msra.mxu0 0.0
      %470 = vmatprep.subr.mxu0 0.0
      %471 = vmatpush1.msra.mxu0 0.0
      %472 = vmatprep.subr.mxu0 0.0
      %473 = vmatpush1.msra.mxu0 0.0
      %474 = vmatprep.subr.mxu0 0.0
      %475 = vmatpush1.msra.mxu0 0.0
      %476 = vmatprep.subr.mxu0 0.0
      %477 = vmatpush1.msra.mxu0 0.0
      %478 = vmatprep.subr.mxu0 0.0
      %479 = vmatpush1.msra.mxu0 0.0
      %480 = vmatprep.subr.mxu0 0.0
      %481 = vmatpush1.msra.mxu0 0.0
      %482 = vmatprep.subr.mxu0 0.0
      %483 = vmatpush1.msra.mxu0 0.0
      %484 = vmatprep.subr.mxu0 0.0
      %485 = vmatpush1.msra.mxu0 0.0
      %486 = vmatprep.subr.mxu0 0.0
      %487 = vmatpush1.msra.mxu0 0.0
      %488 = vmatprep.subr.mxu0 0.0
      %489 = vmatpush1.msra.mxu0 0.0
      %490 = vmatprep.subr.mxu0 0.0
      %491 = vmatpush1.msra.mxu0 0.0
      %492 = vmatprep.subr.mxu0 0.0
      %493 = vmatpush1.msra.mxu0 0.0
      %494 = vmatprep.subr.mxu0 0.0
      %495 = vmatpush1.msra.mxu0 0.0
      %496 = vmatprep.subr.mxu0 0.0
      %497 = vmatpush1.msra.mxu0 0.0
      %498 = vmatprep.mubr.f32.mxu0 0.0
      %499 = vmatmul.mubr.f32.gmra.mrb[0].mxu0 %v410
      %v500 = vpop.f32.mrb[0].mxu0
      %v501 = vadd.f32 %v432, %v500
      %v502 = vpop.f32.mrb[0].mxu0
      %503 = vdwg.mxu0
      %504 = vst [vmem:[#allocation11] sm:$0xff] %v501
    $region57: #{tpu_custom_call.1} parent=1 // pred_fallthru
      _
    // Predicated region
    $region58: #{tpu_custom_call.1} parent=1 // pred_check
      _
    $region59: #{tpu_custom_call.1} parent=1 // pred_check_branch
      %506 = sbr.rel (0) target = $region61
    $region60: #{tpu_custom_call.1} parent=1 // pred_region
      %s508 = ssub.s32 128, 128
      %509 = vsyncadd [#allocation5], %s508
      %s511 = sshll.u32 [#allocation11], 4
      %s512 = int_to_ptr.vmem [resolvable:$true] %s511
      %514 = dma.vmem_to_hbm [thread:$0]  %s512, 128, %s8, [#allocation5]
    $region61: #{tpu_custom_call.1} parent=1 // pred_fallthru
      _
    // Predicated region
    $region62: #{tpu_custom_call.1} parent=1 // pred_check
      _
    $region63: #{tpu_custom_call.1} parent=1 // pred_check_branch
      %516 = sbr.rel (0) target = $region65
    $region64: #{tpu_custom_call.1} parent=1 // pred_region
      %517 = dma.done [#allocation5], 128
    $region65: #{tpu_custom_call.1} parent=1 // pred_fallthru
      _
    %518 = vsyncpa [#allocation4], 1
    %519 = vsyncpa [#allocation7], 1
    %520 = vsyncpa [#allocation10], 1
    %521 = vsyncpa [#allocation5], 1

</llo_original>
